<compile_context>
chip_gen: v5e
topology: v5e:2x2
jax: 0.10.0
libtpu: 0.0.40
codegen_flags: <defaults>
</compile_context>

<pallas_src>
import jax
import jax.numpy as jnp
from jax.experimental import pallas as pl
from jax.experimental.pallas import tpu as pltpu

_HIDDEN = 64      # logical hidden width (matches the PyTorch module)
_H_PAD = 128      # lane-dense padded hidden width used by the kernel


def _round_up(n, m):
    return ((n + m - 1) // m) * m


def _pick_tb(b, d, a_out, x_itemsize):
    """Batch-tile rows: ~4 MiB of x per step, 2x(in+out) buffers <= ~40 MiB."""
    row_bytes = d * x_itemsize + a_out * 4
    target_rows = (4 << 20) // row_bytes
    cap_rows = (40 << 20) // (2 * row_bytes)
    tb = max(8, (min(target_rows, cap_rows, 4096) // 8) * 8)
    tb = min(tb, _round_up(b, 8))
    # v7x megacore: make sure there are >= 2 grid steps when possible so the
    # "parallel" batch axis can shard across both TensorCores.
    if b > 8 and pl.cdiv(b, tb) < 2:
        tb = max(8, _round_up(pl.cdiv(b, 2), 8))
    return tb


def _policy_kernel(x_ref, w1_ref, b1_ref, w2_ref, b2_ref, w3_ref, b3_ref, o_ref):
    # bf16 MXU inputs, f32 accumulation via preferred_element_type.
    x = x_ref[...].astype(jnp.bfloat16)

    # layer 1 + ReLU  (d -> 128, padded hidden cols are exactly zero)
    h1 = jnp.dot(x, w1_ref[...], preferred_element_type=jnp.float32) + b1_ref[...]
    h1 = jnp.maximum(h1, 0.0)

    # layer 2 + ReLU  (128 -> 128)
    h2 = jnp.dot(h1.astype(jnp.bfloat16), w2_ref[...],
                 preferred_element_type=jnp.float32) + b2_ref[...]
    h2 = jnp.maximum(h2, 0.0)

    # layer 3 logits (128 -> action_count, no padding / masking needed)
    logits = jnp.dot(h2.astype(jnp.bfloat16), w3_ref[...],
                     preferred_element_type=jnp.float32) + b3_ref[...]

    # numerically-stable log-softmax over the action axis
    m = jnp.max(logits, axis=-1, keepdims=True)
    shifted = logits - m
    lse = jnp.log(jnp.sum(jnp.exp(shifted), axis=-1, keepdims=True))
    o_ref[...] = (shifted - lse).astype(o_ref.dtype)


def policy_net_forward(x, params, *, tb=None):
    """x: (B, *obs_shape). Returns log-probs of shape (B, action_count)."""
    w1, b1, w2, b2, w3, b3 = params
    b = x.shape[0]
    x_flat = x.reshape(b, -1)                # torch .flatten(1); no dtype cast
    d = x_flat.shape[1]
    h = w1.shape[1]                          # padded hidden width (128)
    a = w3.shape[1]                          # action_count (unpadded)
    x_itemsize = x_flat.dtype.itemsize

    tb_eff = tb if tb is not None else _pick_tb(b, d, a, x_itemsize)
    grid = (pl.cdiv(b, tb_eff),)

    # bf16 weights hit the native MXU rate; biases stay f32.
    w1b = w1.astype(jnp.bfloat16)
    w2b = w2.astype(jnp.bfloat16)
    w3b = w3.astype(jnp.bfloat16)

    param_bytes = 2 * (d * h + h * h + h * a) + 4 * (h + h + a)
    cost = pl.CostEstimate(
        flops=2 * b * (d * h + h * h + h * a),
        transcendentals=b * a,
        bytes_accessed=b * (d * x_itemsize + a * 4) + param_bytes,
    )

    # Scoped-VMEM request: resident weights + double-buffered (x, out) blocks
    # + intermediate headroom; clamped under v7x's 64 MiB physical VMEM.
    x_blk = tb_eff * d * x_itemsize
    out_blk = tb_eff * a * 4
    interm = 3 * tb_eff * h * 4
    vmem_limit = int(min(max(param_bytes + 2 * (x_blk + out_blk) + interm + (2 << 20),
                             32 << 20),
                         56 << 20))

    out = pl.pallas_call(
        _policy_kernel,
        out_shape=jax.ShapeDtypeStruct((b, a), jnp.float32),
        grid=grid,
        in_specs=[
            pl.BlockSpec((tb_eff, d), lambda i: (i, 0)),   # x: batch tile
            pl.BlockSpec((d, h), lambda i: (0, 0)),        # w1 (resident)
            pl.BlockSpec((1, h), lambda i: (0, 0)),        # b1
            pl.BlockSpec((h, h), lambda i: (0, 0)),        # w2
            pl.BlockSpec((1, h), lambda i: (0, 0)),        # b2
            pl.BlockSpec((h, a), lambda i: (0, 0)),        # w3
            pl.BlockSpec((1, a), lambda i: (0, 0)),        # b3
        ],
        out_specs=pl.BlockSpec((tb_eff, a), lambda i: (i, 0)),
        compiler_params=pltpu.CompilerParams(
            dimension_semantics=("parallel",),
            vmem_limit_bytes=vmem_limit),
        cost_estimate=cost,
    )(x_flat, w1b, b1, w2b, b2, w3b, b3)

    return out


def init_params(key, flat_obs_dim, action_count):
    """Deterministic orthogonal init (mirrors init_orthogonal), zero biases.
    The hidden dim is stored zero-padded from 64 to 128 so the kernel's
    intermediates are lane-dense; padding is mathematically inert."""
    k1, k2, k3 = jax.random.split(key, 3)
    ortho = jax.nn.initializers.orthogonal()
    w1r = ortho(k1, (flat_obs_dim, _HIDDEN), jnp.float32)
    w2r = ortho(k2, (_HIDDEN, _HIDDEN), jnp.float32)
    w3r = ortho(k3, (_HIDDEN, action_count), jnp.float32)

    w1 = jnp.zeros((flat_obs_dim, _H_PAD), jnp.float32).at[:, :_HIDDEN].set(w1r)
    w2 = jnp.zeros((_H_PAD, _H_PAD), jnp.float32).at[:_HIDDEN, :_HIDDEN].set(w2r)
    w3 = jnp.zeros((_H_PAD, action_count), jnp.float32).at[:_HIDDEN, :].set(w3r)
    b1 = jnp.zeros((1, _H_PAD), jnp.float32)
    b2 = jnp.zeros((1, _H_PAD), jnp.float32)
    b3 = jnp.zeros((1, action_count), jnp.float32)
    return (w1, b1, w2, b2, w3, b3)


if __name__ == "__main__":
    key = jax.random.PRNGKey(0)
    k_obs, k_par = jax.random.split(key)

    batch = 2
    obs_shape = (4, 4, 4)          # flat_obs_dim = 64
    action_count = 6
    flat_obs_dim = 4 * 4 * 4

    x = jax.random.normal(k_obs, (batch,) + obs_shape, dtype=jnp.float32)
    params = init_params(k_par, flat_obs_dim, action_count)

    out = policy_net_forward(x, params)
    out = jax.block_until_ready(out)

    # pure-JAX reference using the same bf16-input / f32-accum math
    w1, b1, w2, b2, w3, b3 = params
    xf = x.reshape(batch, -1)
    h1 = jnp.maximum(jnp.dot(xf.astype(jnp.bfloat16), w1.astype(jnp.bfloat16),
                             preferred_element_type=jnp.float32) + b1, 0.0)
    h2 = jnp.maximum(jnp.dot(h1.astype(jnp.bfloat16), w2.astype(jnp.bfloat16),
                             preferred_element_type=jnp.float32) + b2, 0.0)
    lg = jnp.dot(h2.astype(jnp.bfloat16), w3.astype(jnp.bfloat16),
                 preferred_element_type=jnp.float32) + b3
    ref = jax.nn.log_softmax(lg, axis=-1)

    # sanity: shape, normalized rows, and agreement with reference
    row_sums = jnp.sum(jnp.exp(out), axis=1)
    assert out.shape == (batch, action_count)
    assert bool(jnp.all(jnp.abs(row_sums - 1.0) < 1e-4))
    assert bool(jnp.max(jnp.abs(out - ref)) < 2e-3)

    print("KERNEL_OK")
</pallas_src>

<mosaic_0001>
module attributes {stable_mosaic.version = 11 : i64} {
  func.func @_policy_kernel(%arg0: i32, %arg1: memref<8x64xf32, #tpu.memory_space<vmem>>, %arg2: memref<64x128xbf16, #tpu.memory_space<vmem>>, %arg3: memref<1x128xf32, #tpu.memory_space<vmem>>, %arg4: memref<128x128xbf16, #tpu.memory_space<vmem>>, %arg5: memref<1x128xf32, #tpu.memory_space<vmem>>, %arg6: memref<128x6xbf16, #tpu.memory_space<vmem>>, %arg7: memref<1x6xf32, #tpu.memory_space<vmem>>, %arg8: memref<8x6xf32, #tpu.memory_space<vmem>>) attributes {dimension_semantics = [#tpu.dimension_semantics<parallel>], iteration_bounds = array<i64: 1>, scalar_prefetch = 0 : i64, scratch_operands = 0 : i64, tpu.core_type = #tpu.core_type<tc>, window_params = [{transform_indices = @transform_0, window_bounds = array<i64: 8, 64>}, {pipeline_mode = #tpu.pipeline_mode<synchronous>, transform_indices = @transform_1, window_bounds = array<i64: 64, 128>}, {pipeline_mode = #tpu.pipeline_mode<synchronous>, transform_indices = @transform_2, window_bounds = array<i64: 1, 128>}, {pipeline_mode = #tpu.pipeline_mode<synchronous>, transform_indices = @transform_3, window_bounds = array<i64: 128, 128>}, {pipeline_mode = #tpu.pipeline_mode<synchronous>, transform_indices = @transform_4, window_bounds = array<i64: 1, 128>}, {pipeline_mode = #tpu.pipeline_mode<synchronous>, transform_indices = @transform_5, window_bounds = array<i64: 128, 6>}, {pipeline_mode = #tpu.pipeline_mode<synchronous>, transform_indices = @transform_6, window_bounds = array<i64: 1, 6>}, {transform_indices = @transform_7, window_bounds = array<i64: 8, 6>}]} {
    %c0 = arith.constant 0 : index
    %c0_0 = arith.constant 0 : index
    %0 = vector.load %arg1[%c0, %c0_0] : memref<8x64xf32, #tpu.memory_space<vmem>>, vector<8x64xf32>
    %1 = arith.truncf %0 : vector<8x64xf32> to vector<8x64xbf16>
    %c0_1 = arith.constant 0 : index
    %c0_2 = arith.constant 0 : index
    %2 = vector.load %arg2[%c0_1, %c0_2] : memref<64x128xbf16, #tpu.memory_space<vmem>>, vector<64x128xbf16>
    %cst = arith.constant dense<0.000000e+00> : vector<8x128xf32>
    %3 = tpu.matmul %1, %2, %cst {dimension_numbers = #tpu.dot_dimension_numbers<[1], [0], [0], [1], [0, 0, 1, 1], [], []>} : vector<8x64xbf16>, vector<64x128xbf16>, vector<8x128xf32> -> vector<8x128xf32>
    %c0_3 = arith.constant 0 : index
    %c0_4 = arith.constant 0 : index
    %4 = vector.load %arg3[%c0_3, %c0_4] : memref<1x128xf32, #tpu.memory_space<vmem>>, vector<1x128xf32>
    %5 = vector.broadcast %4 : vector<1x128xf32> to vector<8x128xf32>
    %6 = arith.addf %3, %5 : vector<8x128xf32>
    %cst_5 = arith.constant 0.000000e+00 : f32
    %7 = vector.broadcast %cst_5 : f32 to vector<8x128xf32>
    %8 = arith.maximumf %6, %7 : vector<8x128xf32>
    %9 = arith.truncf %8 : vector<8x128xf32> to vector<8x128xbf16>
    %c0_6 = arith.constant 0 : index
    %c0_7 = arith.constant 0 : index
    %10 = vector.load %arg4[%c0_6, %c0_7] : memref<128x128xbf16, #tpu.memory_space<vmem>>, vector<128x128xbf16>
    %cst_8 = arith.constant dense<0.000000e+00> : vector<8x128xf32>
    %11 = tpu.matmul %9, %10, %cst_8 {dimension_numbers = #tpu.dot_dimension_numbers<[1], [0], [0], [1], [0, 0, 1, 1], [], []>} : vector<8x128xbf16>, vector<128x128xbf16>, vector<8x128xf32> -> vector<8x128xf32>
    %c0_9 = arith.constant 0 : index
    %c0_10 = arith.constant 0 : index
    %12 = vector.load %arg5[%c0_9, %c0_10] : memref<1x128xf32, #tpu.memory_space<vmem>>, vector<1x128xf32>
    %13 = vector.broadcast %12 : vector<1x128xf32> to vector<8x128xf32>
    %14 = arith.addf %11, %13 : vector<8x128xf32>
    %cst_11 = arith.constant 0.000000e+00 : f32
    %15 = vector.broadcast %cst_11 : f32 to vector<8x128xf32>
    %16 = arith.maximumf %14, %15 : vector<8x128xf32>
    %17 = arith.truncf %16 : vector<8x128xf32> to vector<8x128xbf16>
    %c0_12 = arith.constant 0 : index
    %c0_13 = arith.constant 0 : index
    %18 = vector.load %arg6[%c0_12, %c0_13] : memref<128x6xbf16, #tpu.memory_space<vmem>>, vector<128x6xbf16>
    %cst_14 = arith.constant dense<0.000000e+00> : vector<8x6xf32>
    %19 = tpu.matmul %17, %18, %cst_14 {dimension_numbers = #tpu.dot_dimension_numbers<[1], [0], [0], [1], [0, 0, 1, 1], [], []>} : vector<8x128xbf16>, vector<128x6xbf16>, vector<8x6xf32> -> vector<8x6xf32>
    %c0_15 = arith.constant 0 : index
    %c0_16 = arith.constant 0 : index
    %20 = vector.load %arg7[%c0_15, %c0_16] : memref<1x6xf32, #tpu.memory_space<vmem>>, vector<1x6xf32>
    %21 = vector.broadcast %20 : vector<1x6xf32> to vector<8x6xf32>
    %22 = arith.addf %19, %21 : vector<8x6xf32>
    %cst_17 = arith.constant dense<0xFF800000> : vector<8xf32>
    %23 = vector.multi_reduction <maximumf>, %22, %cst_17 [1] : vector<8x6xf32> to vector<8xf32>
    %24 = vector.shape_cast %23 : vector<8xf32> to vector<8x1xf32>
    %25 = vector.broadcast %24 : vector<8x1xf32> to vector<8x6xf32>
    %26 = arith.subf %22, %25 : vector<8x6xf32>
    %27 = math.exp %26 : vector<8x6xf32>
    %cst_18 = arith.constant dense<0.000000e+00> : vector<8xf32>
    %28 = vector.multi_reduction <add>, %27, %cst_18 [1] : vector<8x6xf32> to vector<8xf32>
    %29 = vector.shape_cast %28 : vector<8xf32> to vector<8x1xf32>
    %30 = math.log %29 : vector<8x1xf32>
    %31 = vector.broadcast %30 : vector<8x1xf32> to vector<8x6xf32>
    %32 = arith.subf %26, %31 : vector<8x6xf32>
    %c0_19 = arith.constant 0 : index
    %c0_20 = arith.constant 0 : index
    %33 = vector.load %arg8[%c0_19, %c0_20] : memref<8x6xf32, #tpu.memory_space<vmem>>, vector<8x6xf32>
    tpu.vector_store %arg8[%c0_19, %c0_20], %32 {strides = array<i32>} : memref<8x6xf32, #tpu.memory_space<vmem>>, vector<8x6xf32>,
    return
  }
  func.func @transform_0(%arg0: i32) -> (i32, i32) {
    %c0_i32 = arith.constant 0 : i32
    %c0_i32_0 = arith.constant 0 : i32
    return %arg0, %c0_i32 : i32, i32
  }
  func.func @transform_1(%arg0: i32) -> (i32, i32) {
    %c0_i32 = arith.constant 0 : i32
    %c0_i32_0 = arith.constant 0 : i32
    %c0_i32_1 = arith.constant 0 : i32
    return %c0_i32, %c0_i32_0 : i32, i32
  }
  func.func @transform_2(%arg0: i32) -> (i32, i32) {
    %c0_i32 = arith.constant 0 : i32
    %c0_i32_0 = arith.constant 0 : i32
    %c0_i32_1 = arith.constant 0 : i32
    return %c0_i32, %c0_i32_0 : i32, i32
  }
  func.func @transform_3(%arg0: i32) -> (i32, i32) {
    %c0_i32 = arith.constant 0 : i32
    %c0_i32_0 = arith.constant 0 : i32
    %c0_i32_1 = arith.constant 0 : i32
    return %c0_i32, %c0_i32_0 : i32, i32
  }
  func.func @transform_4(%arg0: i32) -> (i32, i32) {
    %c0_i32 = arith.constant 0 : i32
    %c0_i32_0 = arith.constant 0 : i32
    %c0_i32_1 = arith.constant 0 : i32
    return %c0_i32, %c0_i32_0 : i32, i32
  }
  func.func @transform_5(%arg0: i32) -> (i32, i32) {
    %c0_i32 = arith.constant 0 : i32
    %c0_i32_0 = arith.constant 0 : i32
    %c0_i32_1 = arith.constant 0 : i32
    return %c0_i32, %c0_i32_0 : i32, i32
  }
  func.func @transform_6(%arg0: i32) -> (i32, i32) {
    %c0_i32 = arith.constant 0 : i32
    %c0_i32_0 = arith.constant 0 : i32
    %c0_i32_1 = arith.constant 0 : i32
    return %c0_i32, %c0_i32_0 : i32, i32
  }
  func.func @transform_7(%arg0: i32) -> (i32, i32) {
    %c0_i32 = arith.constant 0 : i32
    %c0_i32_0 = arith.constant 0 : i32
    return %arg0, %c0_i32 : i32, i32
  }
}

</mosaic_0001>

<llo_original>
// kernel: tpu_custom_call.1
$region0: #{tpu_custom_call.1}
  #allocation0 [shape = 'u32[]', space=smem, size = 0x4, offset = 0x4, fixed_abs, tag = 'smem constant byte address 0x4 - core index']
  #allocation1 [shape = 'u32[72,128]{1,0:T(1,128)}', space=vmem, size = 0x9000, scoped, tag = 'internal scratch']
  %s0 = inlined_call_operand.vmem [shape: f32[2,64], index: 0, kind: input, shape index: {}]
  %s1 = inlined_call_operand.hbm [shape: bf16[64,128], index: 1, kind: input, shape index: {}]
  %s2 = inlined_call_operand.vmem [shape: f32[1,128], index: 2, kind: input, shape index: {}]
  %s3 = inlined_call_operand.vmem [shape: bf16[128,128], index: 3, kind: input, shape index: {}]
  %s4 = inlined_call_operand.vmem [shape: f32[1,128], index: 4, kind: input, shape index: {}]
  %s5 = inlined_call_operand.vmem [shape: bf16[128,6], index: 5, kind: input, shape index: {}]
  %s6 = inlined_call_operand.vmem [shape: f32[1,6], index: 6, kind: input, shape index: {}]
  %s7 = inlined_call_operand.hbm [shape: f32[2,6], index: 7, kind: output, shape index: {}]
  %s8 = sld [smem:[#allocation0]]
  $region42: #{tpu_custom_call.1} parent=0
    _
  %s10 = ssub.s32 1, %s8
  %s11 = scalar_select 0, %s10, %s8
  $region1: #{tpu_custom_call.1} parent=0
    #allocation2 [shape = 'u8[16384]{0}', space=vmem, size = 0x4000, scoped, tag = 'input window, operand 1, single buffered']
    #allocation3 [shape = 's32[1]{0}', space=sflag, size = 0x4, scoped, tag = 'scoped memory for tpu_custom_call.1']
    #allocation4 [shape = 's32[1]{0}', space=sflag, size = 0x4, scoped, tag = 'scoped memory for tpu_custom_call.1']
    #allocation5 [shape = 'u8[4096]{0}', space=vmem, size = 0x1000, scoped, tag = 'output window, operand 0, single buffered']
    %12 = vsyncpa [#allocation3], 0
    %13 = vsyncpa [#allocation4], 0
    // Predicated region
    $region2: #{tpu_custom_call.1} parent=1 // pred_check
      _
    $region3: #{tpu_custom_call.1} parent=1 // pred_check_branch
      %15 = sbr.rel (0) target = $region5
    $region4: #{tpu_custom_call.1} parent=1 // pred_region
      _
    $region5: #{tpu_custom_call.1} parent=1 // pred_fallthru
      _
    // Predicated region
    $region6: #{tpu_custom_call.1} parent=1 // pred_check
      _
    $region7: #{tpu_custom_call.1} parent=1 // pred_check_branch
      %17 = sbr.rel (0) target = $region9
    $region8: #{tpu_custom_call.1} parent=1 // pred_region
      %19 = vsyncadd [#allocation3], 0
      %s20 = sshll.u32 %s1, 4
      %s21 = int_to_ptr.hbm [resolvable:$true] %s20
      %s22 = sshll.u32 [#allocation2], 4
      %s23 = int_to_ptr.vmem [resolvable:$true] %s22
      %28 = dma.hbm_to_vmem [thread:$0]  %s21, 512, %s23, [#allocation3], 64, 64, 4
    $region9: #{tpu_custom_call.1} parent=1 // pred_fallthru
      _
    // Predicated region
    $region10: #{tpu_custom_call.1} parent=1 // pred_check
      _
    $region11: #{tpu_custom_call.1} parent=1 // pred_check_branch
      %30 = sbr.rel (0) target = $region13
    $region12: #{tpu_custom_call.1} parent=1 // pred_region
      _
    $region13: #{tpu_custom_call.1} parent=1 // pred_fallthru
      _
    // Predicated region
    $region14: #{tpu_custom_call.1} parent=1 // pred_check
      _
    $region15: #{tpu_custom_call.1} parent=1 // pred_check_branch
      %32 = sbr.rel (0) target = $region17
    $region16: #{tpu_custom_call.1} parent=1 // pred_region
      _
    $region17: #{tpu_custom_call.1} parent=1 // pred_fallthru
      _
    // Predicated region
    $region18: #{tpu_custom_call.1} parent=1 // pred_check
      _
    $region19: #{tpu_custom_call.1} parent=1 // pred_check_branch
      %34 = sbr.rel (0) target = $region21
    $region20: #{tpu_custom_call.1} parent=1 // pred_region
      _
    $region21: #{tpu_custom_call.1} parent=1 // pred_fallthru
      _
    // Predicated region
    $region22: #{tpu_custom_call.1} parent=1 // pred_check
      _
    $region23: #{tpu_custom_call.1} parent=1 // pred_check_branch
      %36 = sbr.rel (0) target = $region25
    $region24: #{tpu_custom_call.1} parent=1 // pred_region
      _
    $region25: #{tpu_custom_call.1} parent=1 // pred_fallthru
      _
    // Predicated region
    $region26: #{tpu_custom_call.1} parent=1 // pred_check
      _
    $region27: #{tpu_custom_call.1} parent=1 // pred_check_branch
      %38 = sbr.rel (0) target = $region29
    $region28: #{tpu_custom_call.1} parent=1 // pred_region
      _
    $region29: #{tpu_custom_call.1} parent=1 // pred_fallthru
      _
    // Predicated region
    $region30: #{tpu_custom_call.1} parent=1 // pred_check
      _
    $region31: #{tpu_custom_call.1} parent=1 // pred_check_branch
      %40 = sbr.rel (0) target = $region33
    $region32: #{tpu_custom_call.1} parent=1 // pred_region
      %42 = dma.done [#allocation3], 512
    $region33: #{tpu_custom_call.1} parent=1 // pred_fallthru
      _
    %v44 = vld [vmem:[%s0] sm:$0xff]
    %v45 = vpack.c.bf16 %v44, %v44
    %v46 = vld [vmem:[#allocation2] sm:$0xf]
    %v47 = vld [vmem:[#allocation2 + $0x4] sm:$0xf]
    %v48 = vld [vmem:[#allocation2 + $0x8] sm:$0xf]
    %v49 = vld [vmem:[#allocation2 + $0xc] sm:$0xf]
    %v50 = vld [vmem:[#allocation2 + $0x10] sm:$0xf]
    %v51 = vld [vmem:[#allocation2 + $0x14] sm:$0xf]
    %v52 = vld [vmem:[#allocation2 + $0x18] sm:$0xf]
    %v53 = vld [vmem:[#allocation2 + $0x1c] sm:$0xf]
    %v54 = vld [vmem:[%s2] sm:$0x1]
    %v56 = vperm.slane %v54, 0
    %v66 = vunpack.c.l.b16 %v46
    %v67 = vunpack.c.l.b16 %v47
    %v68 = vunpack.c.l.b16 %v48
    %v69 = vunpack.c.l.b16 %v49
    %v70 = vunpack.c.l.b16 %v50
    %v71 = vunpack.c.l.b16 %v51
    %v72 = vunpack.c.l.b16 %v52
    %v73 = vunpack.c.l.b16 %v53
    %v74 = vpack.c.b16 %v67, %v66
    %v75 = vpack.c.b16 %v69, %v68
    %v76 = vpack.c.b16 %v71, %v70
    %v77 = vpack.c.b16 %v73, %v72
    %vm82 = vcmask 523264
    %v84 = vsel %vm82, %v45, 0
    %86 = vmatpush.bf16.msra.mxu0 0
    %87 = vmatpush.bf16.msra.mxu0 0
    %88 = vmatpush.bf16.msra.mxu0 0
    %89 = vmatpush.bf16.msra.mxu0 0
    %90 = vmatpush.bf16.msra.mxu0 %v77
    %91 = vmatpush.bf16.msra.mxu0 %v76
    %92 = vmatpush.bf16.msra.mxu0 %v75
    %93 = vmatpush.bf16.msra.mxu0 %v74
    %94 = vmatmul.bf16.gmra.mxu0 %v84
    %v95 = vpop.f32.mrf.mxu0
    %v96 = vadd.f32 %v56, %v95
    %v97 = vpop.f32.mrf.mxu0
    %98 = vdwg.mxu0
    %v99 = vmax.f32 %v96, 0.0
    %v100 = vpack.c.bf16 %v99, %v99
    %v101 = vld [vmem:[%s3] sm:$0xf]
    %v102 = vld [vmem:[%s3 + $0x4] sm:$0xf]
    %v103 = vld [vmem:[%s3 + $0x8] sm:$0xf]
    %v104 = vld [vmem:[%s3 + $0xc] sm:$0xf]
    %v105 = vld [vmem:[%s3 + $0x10] sm:$0xf]
    %v106 = vld [vmem:[%s3 + $0x14] sm:$0xf]
    %v107 = vld [vmem:[%s3 + $0x18] sm:$0xf]
    %v108 = vld [vmem:[%s3 + $0x1c] sm:$0xf]
    %v109 = vld [vmem:[%s3 + $0x20] sm:$0xf]
    %v110 = vld [vmem:[%s3 + $0x24] sm:$0xf]
    %v111 = vld [vmem:[%s3 + $0x28] sm:$0xf]
    %v112 = vld [vmem:[%s3 + $0x2c] sm:$0xf]
    %v113 = vld [vmem:[%s3 + $0x30] sm:$0xf]
    %v114 = vld [vmem:[%s3 + $0x34] sm:$0xf]
    %v115 = vld [vmem:[%s3 + $0x38] sm:$0xf]
    %v116 = vld [vmem:[%s3 + $0x3c] sm:$0xf]
    %v117 = vld [vmem:[%s4] sm:$0x1]
    %v119 = vperm.slane %v117, 0
    %v137 = vunpack.c.l.b16 %v101
    %v138 = vunpack.c.l.b16 %v102
    %v139 = vunpack.c.l.b16 %v103
    %v140 = vunpack.c.l.b16 %v104
    %v141 = vunpack.c.l.b16 %v105
    %v142 = vunpack.c.l.b16 %v106
    %v143 = vunpack.c.l.b16 %v107
    %v144 = vunpack.c.l.b16 %v108
    %v145 = vunpack.c.l.b16 %v109
    %v146 = vunpack.c.l.b16 %v110
    %v147 = vunpack.c.l.b16 %v111
    %v148 = vunpack.c.l.b16 %v112
    %v149 = vunpack.c.l.b16 %v113
    %v150 = vunpack.c.l.b16 %v114
    %v151 = vunpack.c.l.b16 %v115
    %v152 = vunpack.c.l.b16 %v116
    %v153 = vpack.c.b16 %v138, %v137
    %v154 = vpack.c.b16 %v140, %v139
    %v155 = vpack.c.b16 %v142, %v141
    %v156 = vpack.c.b16 %v144, %v143
    %v157 = vpack.c.b16 %v146, %v145
    %v158 = vpack.c.b16 %v148, %v147
    %v159 = vpack.c.b16 %v150, %v149
    %v160 = vpack.c.b16 %v152, %v151
    %169 = vmatpush.bf16.msra.mxu0 %v160
    %170 = vmatpush.bf16.msra.mxu0 %v159
    %171 = vmatpush.bf16.msra.mxu0 %v158
    %172 = vmatpush.bf16.msra.mxu0 %v157
    %173 = vmatpush.bf16.msra.mxu0 %v156
    %174 = vmatpush.bf16.msra.mxu0 %v155
    %175 = vmatpush.bf16.msra.mxu0 %v154
    %176 = vmatpush.bf16.msra.mxu0 %v153
    %177 = vmatmul.bf16.gmra.mxu0 %v100
    %v178 = vpop.f32.mrf.mxu0
    %v179 = vadd.f32 %v119, %v178
    %v180 = vpop.f32.mrf.mxu0
    %181 = vdwg.mxu0
    %v182 = vmax.f32 %v179, 0.0
    %v183 = vpack.c.bf16 %v182, %v182
    %v184 = vld [vmem:[%s5] sm:$0xf]
    %v185 = vld [vmem:[%s5 + $0x4] sm:$0xf]
    %v186 = vld [vmem:[%s5 + $0x8] sm:$0xf]
    %v187 = vld [vmem:[%s5 + $0xc] sm:$0xf]
    %v188 = vld [vmem:[%s5 + $0x10] sm:$0xf]
    %v189 = vld [vmem:[%s5 + $0x14] sm:$0xf]
    %v190 = vld [vmem:[%s5 + $0x18] sm:$0xf]
    %v191 = vld [vmem:[%s5 + $0x1c] sm:$0xf]
    %v192 = vld [vmem:[%s5 + $0x20] sm:$0xf]
    %v193 = vld [vmem:[%s5 + $0x24] sm:$0xf]
    %v194 = vld [vmem:[%s5 + $0x28] sm:$0xf]
    %v195 = vld [vmem:[%s5 + $0x2c] sm:$0xf]
    %v196 = vld [vmem:[%s5 + $0x30] sm:$0xf]
    %v197 = vld [vmem:[%s5 + $0x34] sm:$0xf]
    %v198 = vld [vmem:[%s5 + $0x38] sm:$0xf]
    %v199 = vld [vmem:[%s5 + $0x3c] sm:$0xf]
    %v200 = vld [vmem:[%s6] sm:$0x1]
    %v202 = vperm.slane %v200, 0
    %v220 = vunpack.c.l.b16 %v184
    %v221 = vunpack.c.l.b16 %v185
    %v222 = vunpack.c.l.b16 %v186
    %v223 = vunpack.c.l.b16 %v187
    %v224 = vunpack.c.l.b16 %v188
    %v225 = vunpack.c.l.b16 %v189
    %v226 = vunpack.c.l.b16 %v190
    %v227 = vunpack.c.l.b16 %v191
    %v228 = vunpack.c.l.b16 %v192
    %v229 = vunpack.c.l.b16 %v193
    %v230 = vunpack.c.l.b16 %v194
    %v231 = vunpack.c.l.b16 %v195
    %v232 = vunpack.c.l.b16 %v196
    %v233 = vunpack.c.l.b16 %v197
    %v234 = vunpack.c.l.b16 %v198
    %v235 = vunpack.c.l.b16 %v199
    %v236 = vpack.c.b16 %v221, %v220
    %v237 = vpack.c.b16 %v223, %v222
    %v238 = vpack.c.b16 %v225, %v224
    %v239 = vpack.c.b16 %v227, %v226
    %v240 = vpack.c.b16 %v229, %v228
    %v241 = vpack.c.b16 %v231, %v230
    %v242 = vpack.c.b16 %v233, %v232
    %v243 = vpack.c.b16 %v235, %v234
    %252 = vmatpush.bf16.msra.mxu0 %v243
    %253 = vmatpush.bf16.msra.mxu0 %v242
    %254 = vmatpush.bf16.msra.mxu0 %v241
    %255 = vmatpush.bf16.msra.mxu0 %v240
    %256 = vmatpush.bf16.msra.mxu0 %v239
    %257 = vmatpush.bf16.msra.mxu0 %v238
    %258 = vmatpush.bf16.msra.mxu0 %v237
    %259 = vmatpush.bf16.msra.mxu0 %v236
    %260 = vmatmul.bf16.gmra.mxu0 %v183
    %v261 = vpop.f32.mrf.mxu0
    %v262 = vadd.f32 %v202, %v261
    %v263 = vpop.f32.mrf.mxu0
    %264 = vdwg.mxu0
    %vm265 = vcmask 48128
    %v266 = vsel %vm265, %v262, -inf
    %267 = vmax.xlane.f32.xlu0 %v266
    %v268 = vpop.xlane.xlu0 %267
    %v269 = vsub.f32 %v262, %v268
    %v270 = vmul.f32 %v269, 1.442695
    %v271 = vpow.pop %v270
    %v272 = vsel %vm265, %v271, 0.0
    %273 = vadd.xlane.f32.xlu0 %v272
    %v274 = vpop.xlane.xlu0 %273
    %v275 = vlog2.pop %v274
    %v276 = vmul.f32 %v275, 0.6931472
    %v277 = vsub.f32 %v269, %v276
    %278 = vst.msk [vmem:[#allocation5] sm:$0xff] %vm265, %v277
    // Predicated region
    $region34: #{tpu_custom_call.1} parent=1 // pred_check
      _
    $region35: #{tpu_custom_call.1} parent=1 // pred_check_branch
      %280 = sbr.rel (0) target = $region37
    $region36: #{tpu_custom_call.1} parent=1 // pred_region
      %282 = vsyncadd [#allocation4], 96
      %s283 = sshll.u32 [#allocation5], 4
      %s284 = int_to_ptr.vmem [resolvable:$true] %s283
      %s285 = sshll.u32 %s7, 4
      %s286 = int_to_ptr.hbm [resolvable:$true] %s285
      %291 = dma.vmem_to_hbm [thread:$0]  %s284, 32, %s286, [#allocation4], 32, 32, 2
    $region37: #{tpu_custom_call.1} parent=1 // pred_fallthru
      _
    // Predicated region
    $region38: #{tpu_custom_call.1} parent=1 // pred_check
      _
    $region39: #{tpu_custom_call.1} parent=1 // pred_check_branch
      %293 = sbr.rel (0) target = $region41
    $region40: #{tpu_custom_call.1} parent=1 // pred_region
      %295 = dma.done [#allocation4], 128
    $region41: #{tpu_custom_call.1} parent=1 // pred_fallthru
      _
    %296 = vsyncpa [#allocation3], 1
    %297 = vsyncpa [#allocation4], 1

</llo_original>
